<compile_context>
chip_gen: v7x
topology: tpu7x:2x2x1
jax: 0.10.0
libtpu: 0.0.40
codegen_flags: <defaults>
</compile_context>

<pallas_src>
import functools

import jax
import jax.numpy as jnp
from jax import lax
from jax.experimental import pallas as pl
from jax.experimental.pallas import tpu as pltpu

ENCODER_CHANNEL = 128   # stands in for the global `encoder_channel` (lane-dense)
BN_EPS = 1e-5


# ------------------------- Pallas kernels -------------------------

def _aspp_fused_kernel(x_ref, w_ref, wproj_ref, sb_ref, bb_ref, sp_ref, bp_ref,
                       gap_ref, o_ref, y_acc, *, branch_meta, H, W, maxpad):
    """Fused ASPP: 4 conv branches + BN + ReLU + 1x1 projection + BN + ReLU.

    x_ref:     (1, Hp, Wp, ck)    padded NHWC input, one batch, one Cin chunk
    w_ref:     (T, ck, Cout)      stacked per-tap conv weights for this chunk
    wproj_ref: (4, Cout, Cout)    per-branch slice of the projection weight (f32)
    sb_ref/bb_ref: (4, 1, Cout)   per-branch BN scale / bias (f32)
    sp_ref/bp_ref: (1, Cout)      projection BN scale / bias (f32)
    gap_ref:   (1, 1, Cout)       GAP-branch contribution (already projected, f32)
    o_ref:     (1, H*W, Cout)     final output block (f32)
    y_acc:     (4, H*W, Cout)     f32 scratch: pre-BN conv accumulators per branch
    """
    k = pl.program_id(1)
    HW = H * W
    ck = x_ref.shape[-1]

    @pl.when(k == 0)
    def _init():
        y_acc[...] = jnp.zeros_like(y_acc)

    # Accumulate every branch's (pre-BN) conv output for this Cin chunk.
    # The spatial shift of each dilated tap is a static slice of the padded
    # VMEM block (no im2col, no extra HBM traffic).
    for b, (tap_base, ksize, dil, pad) in enumerate(branch_meta):
        partial = None
        for kh in range(ksize):
            for kw in range(ksize):
                t = tap_base + kh * ksize + kw
                oh = maxpad - pad + kh * dil
                ow = maxpad - pad + kw * dil
                slab = x_ref[0, oh:oh + H, ow:ow + W, :].reshape(HW, ck)
                contrib = jnp.dot(slab, w_ref[t],
                                  preferred_element_type=jnp.float32)
                partial = contrib if partial is None else partial + contrib
        y_acc[b] = y_acc[b] + partial

    # After the last Cin chunk: BN+ReLU each branch, apply its slice of the
    # fused 1x1 projection, add the GAP contribution, final BN+ReLU, write out.
    @pl.when(k == pl.num_programs(1) - 1)
    def _finalize():
        proj = gap_ref[0]                                   # (1, Cout), f32
        for b in range(len(branch_meta)):
            yb = jnp.maximum(y_acc[b] * sb_ref[b] + bb_ref[b], 0.0)
            proj = proj + jnp.dot(yb, wproj_ref[b],
                                  preferred_element_type=jnp.float32)
        o_ref[0] = jnp.maximum(proj * sp_ref[...] + bp_ref[...],
                               0.0).astype(o_ref.dtype)


def _gap_proj_kernel(xm_ref, wg_ref, sg_ref, bg_ref, wpg_ref, o_ref):
    # xm: (N, Cin) spatial means; 1x1 conv + BN + ReLU, then the GAP slice of
    # the projection weight -> per-batch projection bias (N, Cout).
    g = jnp.dot(xm_ref[...], wg_ref[...], preferred_element_type=jnp.float32)
    g = jnp.maximum(g * sg_ref[...] + bg_ref[...], 0.0)
    o_ref[...] = jnp.dot(g, wpg_ref[...],
                         preferred_element_type=jnp.float32).astype(o_ref.dtype)


# ------------------------- wrappers -------------------------

def _vmem_limit_bytes():
    cap = 64 * 1024 * 1024                  # conservative fallback (v7x physical)
    try:
        cap = int(pltpu.get_tpu_info().vmem_capacity_bytes)
    except Exception:
        pass
    return min((cap * 3) // 4, 96 * 1024 * 1024)


def _choose_cin_chunk(cin, *, hp, wp, hw, cout, n_taps, itemsize,
                      budget_bytes=40 * 1024 * 1024):
    """Largest lane-aligned Cin chunk whose double-buffered blocks + scratch fit."""
    cands = [c for c in (1024, 512, 256, 128) if cin % c == 0]
    if not cands:
        return cin                           # full dim: always layout-legal
    fixed = 4 * hw * cout * 4 + 2 * hw * cout * 4      # y_acc scratch + out blocks

    def fits(c):
        return fixed + 2 * c * itemsize * (hp * wp + n_taps * cout) <= budget_bytes

    for c in cands:                          # prefer >=2 reduction steps
        if cin // c >= 2 and fits(c):
            return c
    for c in cands:
        if fits(c):
            return c
    return cands[-1]


def gap_proj_bias(xmean, w_gap_mat, bn_scale, bn_bias, w_proj_gap):
    N, Cin = xmean.shape
    Cout = w_gap_mat.shape[1]
    return pl.pallas_call(
        _gap_proj_kernel,
        out_shape=jax.ShapeDtypeStruct((N, Cout), jnp.float32),
        grid=(1,),
        in_specs=[
            pl.BlockSpec((N, Cin), lambda i: (0, 0)),
            pl.BlockSpec((Cin, Cout), lambda i: (0, 0)),
            pl.BlockSpec((1, Cout), lambda i: (0, 0)),
            pl.BlockSpec((1, Cout), lambda i: (0, 0)),
            pl.BlockSpec((Cout, Cout), lambda i: (0, 0)),
        ],
        out_specs=pl.BlockSpec((N, Cout), lambda i: (0, 0)),
    )(xmean, w_gap_mat, bn_scale.reshape(1, -1), bn_bias.reshape(1, -1),
      w_proj_gap)


def aspp_forward(x_nchw, p, compute_dtype=jnp.bfloat16):
    N, Cin, H, W = x_nchw.shape
    Cout = int(p["out_ch"])
    maxpad = int(p["maxpad"])
    branch_meta = p["branch_meta"]

    x = jnp.transpose(x_nchw, (0, 2, 3, 1))                    # NHWC, f32

    # GAP branch -> per-batch projection bias (mean is a tiny plain-JAX reduce).
    xmean = jnp.mean(x, axis=(1, 2))                           # (N, Cin) f32
    gap_contrib = gap_proj_bias(xmean, p["w_gap_mat"], p["bn_scale"],
                                p["bn_bias"], p["w_proj_gap"])  # (N, Cout) f32
    gap_contrib = gap_contrib.reshape(N, 1, Cout)

    # Single padded copy of the input (largest dilation); bf16 MXU operands.
    xpad = jnp.pad(x.astype(compute_dtype),
                   ((0, 0), (maxpad, maxpad), (maxpad, maxpad), (0, 0)))
    Hp, Wp = H + 2 * maxpad, W + 2 * maxpad
    w_taps = p["w_taps"].astype(compute_dtype)                 # (T, Cin, Cout)
    T = w_taps.shape[0]

    itemsize = jnp.dtype(compute_dtype).itemsize
    ck = _choose_cin_chunk(Cin, hp=Hp, wp=Wp, hw=H * W, cout=Cout,
                           n_taps=T, itemsize=itemsize)
    Kc = Cin // ck

    sb = jnp.broadcast_to(p["bn_scale"][None, None, :], (4, 1, Cout))
    bb = jnp.broadcast_to(p["bn_bias"][None, None, :], (4, 1, Cout))
    sp = p["bn_scale"].reshape(1, Cout)
    bp = p["bn_bias"].reshape(1, Cout)

    taps_total = sum(ks * ks for _, ks, _, _ in branch_meta)
    cost = pl.CostEstimate(
        flops=int(2 * N * H * W * Cout * (taps_total * Cin + 4 * Cout)),
        transcendentals=0,
        bytes_accessed=int(N * Hp * Wp * Cin * itemsize
                           + N * T * Cin * Cout * itemsize
                           + N * H * W * Cout * 4))

    kernel = functools.partial(_aspp_fused_kernel, branch_meta=branch_meta,
                               H=H, W=W, maxpad=maxpad)
    out = pl.pallas_call(
        kernel,
        out_shape=jax.ShapeDtypeStruct((N, H * W, Cout), jnp.float32),
        grid_spec=pltpu.PrefetchScalarGridSpec(
            num_scalar_prefetch=0,
            grid=(N, Kc),
            in_specs=[
                pl.BlockSpec((1, Hp, Wp, ck), lambda n, k: (n, 0, 0, k)),
                pl.BlockSpec((T, ck, Cout), lambda n, k: (0, k, 0)),
                pl.BlockSpec((4, Cout, Cout), lambda n, k: (0, 0, 0)),
                pl.BlockSpec((4, 1, Cout), lambda n, k: (0, 0, 0)),
                pl.BlockSpec((4, 1, Cout), lambda n, k: (0, 0, 0)),
                pl.BlockSpec((1, Cout), lambda n, k: (0, 0)),
                pl.BlockSpec((1, Cout), lambda n, k: (0, 0)),
                pl.BlockSpec((1, 1, Cout), lambda n, k: (n, 0, 0)),
            ],
            out_specs=pl.BlockSpec((1, H * W, Cout), lambda n, k: (n, 0, 0)),
            scratch_shapes=[pltpu.VMEM((4, H * W, Cout), jnp.float32)],
        ),
        compiler_params=pltpu.CompilerParams(
            dimension_semantics=("parallel", "arbitrary"),
            vmem_limit_bytes=_vmem_limit_bytes()),
        cost_estimate=cost,
    )(xpad, w_taps, p["w_proj_br"], sb, bb, sp, bp, gap_contrib)

    out = out.reshape(N, H, W, Cout)
    # TODO(synk): nn.Dropout(0.5) is identity in eval mode; training dropout not applied.
    return jnp.transpose(out, (0, 3, 1, 2))                    # back to NCHW


# ------------------------- params -------------------------

def kaiming_normal(key, shape):
    fan_in = shape[1] * shape[2] * shape[3]
    std = (2.0 / fan_in) ** 0.5
    return std * jax.random.normal(key, shape, dtype=jnp.float32)


def init_params(key, in_ch, out_ch, output_stride=16):
    if output_stride == 16:
        dilations = [1, 6, 12, 18]
    elif output_stride == 8:
        dilations = [1, 12, 24, 36]
    else:
        raise NotImplementedError
    ksizes = [1, 3, 3, 3]
    pads = [((k - 1) * (d - 1) + k) // 2 for k, d in zip(ksizes, dilations)]
    maxpad = max(pads)

    keys = jax.random.split(key, 6)
    branches, taps, branch_meta = [], [], []
    tap_base = 0
    for i, (k, d, pad) in enumerate(zip(ksizes, dilations, pads)):
        w = kaiming_normal(keys[i], (out_ch, in_ch, k, k))
        branches.append({"w_oihw": w, "k": k, "d": d, "pad": pad})
        # (Cout, Cin, k, k) -> (k*k, Cin, Cout); tap order = (kh, kw) row-major.
        taps.append(jnp.transpose(w, (2, 3, 1, 0)).reshape(k * k, in_ch, out_ch))
        branch_meta.append((tap_base, k, d, pad))
        tap_base += k * k
    w_taps = jnp.concatenate(taps, axis=0)                     # (28, Cin, Cout)

    w_gap = kaiming_normal(keys[4], (out_ch, in_ch, 1, 1))
    w_proj = kaiming_normal(keys[5], (out_ch, out_ch * 5, 1, 1))
    w_proj_mat = jnp.transpose(w_proj[:, :, 0, 0], (1, 0))     # (5*Cout, Cout)

    # BatchNorm (inference): gamma=1, beta=0, running_mean=0, running_var=1.
    bn_scale = jnp.full((out_ch,), 1.0 / jnp.sqrt(1.0 + BN_EPS), jnp.float32)
    bn_bias = jnp.zeros((out_ch,), jnp.float32)

    return {
        "out_ch": out_ch,
        "maxpad": maxpad,
        "branches": branches,
        "branch_meta": tuple(branch_meta),
        "w_taps": w_taps,
        "w_gap_oihw": w_gap,
        "w_gap_mat": jnp.transpose(w_gap[:, :, 0, 0], (1, 0)),
        "w_proj_oihw": w_proj,
        "w_proj_br": w_proj_mat[:4 * out_ch].reshape(4, out_ch, out_ch),
        "w_proj_gap": w_proj_mat[4 * out_ch:],
        "bn_scale": bn_scale,
        "bn_bias": bn_bias,
    }


# ------------------------- pure-JAX reference -------------------------

def _bn_relu_ref(y_nchw, scale, bias):
    return jnp.maximum(
        y_nchw * scale[None, :, None, None] + bias[None, :, None, None], 0.0)


def _conv_ref(x, w, dilation, padding):
    return lax.conv_general_dilated(
        x, w, window_strides=(1, 1),
        padding=[(padding, padding), (padding, padding)],
        rhs_dilation=(dilation, dilation),
        dimension_numbers=("NCHW", "OIHW", "NCHW"))


def aspp_ref(x, p):
    N, Cin, H, W = x.shape
    s, b = p["bn_scale"], p["bn_bias"]
    outs = []
    for br in p["branches"]:
        outs.append(_bn_relu_ref(_conv_ref(x, br["w_oihw"], br["d"], br["pad"]), s, b))
    g = jnp.mean(x, axis=(2, 3), keepdims=True)
    g = _bn_relu_ref(_conv_ref(g, p["w_gap_oihw"], 1, 0), s, b)
    outs.append(jnp.broadcast_to(g, (N, g.shape[1], H, W)))
    cat = jnp.concatenate(outs, axis=1)
    return _bn_relu_ref(_conv_ref(cat, p["w_proj_oihw"], 1, 0), s, b)


# ------------------------- main -------------------------

if __name__ == "__main__":
    key = jax.random.PRNGKey(0)
    kx, kp = jax.random.split(key)

    # Small stand-in shapes (the real module uses in_ch=2048, out_ch=256,
    # H=W~33).  Channels are kept lane-aligned so the kernel output is
    # lane-dense and the Cin-chunk reduction path (Kc=2) is exercised.
    N, IN_CH, H, W = 2, 256, 16, 16
    x = jax.random.normal(kx, (N, IN_CH, H, W), dtype=jnp.float32)
    params = init_params(kp, IN_CH, ENCODER_CHANNEL, output_stride=16)

    ref = jax.block_until_ready(aspp_ref(x, params))

    # f32 MXU operands: tight check against the f32 reference.
    out_f32 = jax.block_until_ready(
        aspp_forward(x, params, compute_dtype=jnp.float32))
    assert out_f32.shape == (N, ENCODER_CHANNEL, H, W), out_f32.shape
    assert bool(jnp.all(jnp.isfinite(out_f32)))
    assert bool(jnp.allclose(out_f32, ref, rtol=1e-3, atol=1e-3)), \
        float(jnp.max(jnp.abs(out_f32 - ref)))

    # bf16 MXU operands (recommended fast path on v6e/v7x), f32 accumulation.
    out_bf16 = jax.block_until_ready(
        aspp_forward(x, params, compute_dtype=jnp.bfloat16))
    assert out_bf16.shape == (N, ENCODER_CHANNEL, H, W), out_bf16.shape
    assert bool(jnp.allclose(out_bf16, ref, rtol=3e-2, atol=3e-2)), \
        float(jnp.max(jnp.abs(out_bf16 - ref)))

    print("KERNEL_OK")
</pallas_src>

<mosaic_0001>
module attributes {stable_mosaic.version = 11 : i64} {
  func.func @_gap_proj_kernel(%arg0: i32, %arg1: memref<2x256xf32, #tpu.memory_space<vmem>>, %arg2: memref<256x128xf32, #tpu.memory_space<vmem>>, %arg3: memref<1x128xf32, #tpu.memory_space<vmem>>, %arg4: memref<1x128xf32, #tpu.memory_space<vmem>>, %arg5: memref<128x128xf32, #tpu.memory_space<vmem>>, %arg6: memref<2x128xf32, #tpu.memory_space<vmem>>) attributes {dimension_semantics = [#tpu.dimension_semantics<arbitrary>], iteration_bounds = array<i64: 1>, scalar_prefetch = 0 : i64, scratch_operands = 0 : i64, tpu.core_type = #tpu.core_type<tc>, window_params = [{pipeline_mode = #tpu.pipeline_mode<synchronous>, transform_indices = @transform_0, window_bounds = array<i64: 2, 256>}, {pipeline_mode = #tpu.pipeline_mode<synchronous>, transform_indices = @transform_1, window_bounds = array<i64: 256, 128>}, {pipeline_mode = #tpu.pipeline_mode<synchronous>, transform_indices = @transform_2, window_bounds = array<i64: 1, 128>}, {pipeline_mode = #tpu.pipeline_mode<synchronous>, transform_indices = @transform_3, window_bounds = array<i64: 1, 128>}, {pipeline_mode = #tpu.pipeline_mode<synchronous>, transform_indices = @transform_4, window_bounds = array<i64: 128, 128>}, {pipeline_mode = #tpu.pipeline_mode<synchronous>, transform_indices = @transform_5, window_bounds = array<i64: 2, 128>}]} {
    %c0 = arith.constant 0 : index
    %c0_0 = arith.constant 0 : index
    %0 = vector.load %arg1[%c0, %c0_0] : memref<2x256xf32, #tpu.memory_space<vmem>>, vector<2x256xf32>
    %c0_1 = arith.constant 0 : index
    %c0_2 = arith.constant 0 : index
    %1 = vector.load %arg2[%c0_1, %c0_2] : memref<256x128xf32, #tpu.memory_space<vmem>>, vector<256x128xf32>
    %cst = arith.constant dense<0.000000e+00> : vector<2x128xf32>
    %2 = tpu.matmul %0, %1, %cst {dimension_numbers = #tpu.dot_dimension_numbers<[1], [0], [0], [1], [0, 0, 1, 1], [], []>} : vector<2x256xf32>, vector<256x128xf32>, vector<2x128xf32> -> vector<2x128xf32>
    %c0_3 = arith.constant 0 : index
    %c0_4 = arith.constant 0 : index
    %3 = vector.load %arg3[%c0_3, %c0_4] : memref<1x128xf32, #tpu.memory_space<vmem>>, vector<1x128xf32>
    %4 = vector.broadcast %3 : vector<1x128xf32> to vector<2x128xf32>
    %5 = arith.mulf %2, %4 : vector<2x128xf32>
    %c0_5 = arith.constant 0 : index
    %c0_6 = arith.constant 0 : index
    %6 = vector.load %arg4[%c0_5, %c0_6] : memref<1x128xf32, #tpu.memory_space<vmem>>, vector<1x128xf32>
    %7 = vector.broadcast %6 : vector<1x128xf32> to vector<2x128xf32>
    %8 = arith.addf %5, %7 : vector<2x128xf32>
    %cst_7 = arith.constant 0.000000e+00 : f32
    %9 = vector.broadcast %cst_7 : f32 to vector<2x128xf32>
    %10 = arith.maximumf %8, %9 : vector<2x128xf32>
    %c0_8 = arith.constant 0 : index
    %c0_9 = arith.constant 0 : index
    %11 = vector.load %arg5[%c0_8, %c0_9] : memref<128x128xf32, #tpu.memory_space<vmem>>, vector<128x128xf32>
    %cst_10 = arith.constant dense<0.000000e+00> : vector<2x128xf32>
    %12 = tpu.matmul %10, %11, %cst_10 {dimension_numbers = #tpu.dot_dimension_numbers<[1], [0], [0], [1], [0, 0, 1, 1], [], []>} : vector<2x128xf32>, vector<128x128xf32>, vector<2x128xf32> -> vector<2x128xf32>
    %c0_11 = arith.constant 0 : index
    %c0_12 = arith.constant 0 : index
    %13 = vector.load %arg6[%c0_11, %c0_12] : memref<2x128xf32, #tpu.memory_space<vmem>>, vector<2x128xf32>
    tpu.vector_store %arg6[%c0_11, %c0_12], %12 {strides = array<i32>} : memref<2x128xf32, #tpu.memory_space<vmem>>, vector<2x128xf32>,
    return
  }
  func.func @transform_0(%arg0: i32) -> (i32, i32) {
    %c0_i32 = arith.constant 0 : i32
    %c0_i32_0 = arith.constant 0 : i32
    %c0_i32_1 = arith.constant 0 : i32
    return %c0_i32, %c0_i32_0 : i32, i32
  }
  func.func @transform_1(%arg0: i32) -> (i32, i32) {
    %c0_i32 = arith.constant 0 : i32
    %c0_i32_0 = arith.constant 0 : i32
    %c0_i32_1 = arith.constant 0 : i32
    return %c0_i32, %c0_i32_0 : i32, i32
  }
  func.func @transform_2(%arg0: i32) -> (i32, i32) {
    %c0_i32 = arith.constant 0 : i32
    %c0_i32_0 = arith.constant 0 : i32
    %c0_i32_1 = arith.constant 0 : i32
    return %c0_i32, %c0_i32_0 : i32, i32
  }
  func.func @transform_3(%arg0: i32) -> (i32, i32) {
    %c0_i32 = arith.constant 0 : i32
    %c0_i32_0 = arith.constant 0 : i32
    %c0_i32_1 = arith.constant 0 : i32
    return %c0_i32, %c0_i32_0 : i32, i32
  }
  func.func @transform_4(%arg0: i32) -> (i32, i32) {
    %c0_i32 = arith.constant 0 : i32
    %c0_i32_0 = arith.constant 0 : i32
    %c0_i32_1 = arith.constant 0 : i32
    return %c0_i32, %c0_i32_0 : i32, i32
  }
  func.func @transform_5(%arg0: i32) -> (i32, i32) {
    %c0_i32 = arith.constant 0 : i32
    %c0_i32_0 = arith.constant 0 : i32
    %c0_i32_1 = arith.constant 0 : i32
    return %c0_i32, %c0_i32_0 : i32, i32
  }
}

</mosaic_0001>

<llo_original>
// kernel: tpu_custom_call.1
$region0: #{tpu_custom_call.1}
  #allocation0 [shape = 'u32[]', space=smem, size = 0x4, offset = 0x4, fixed_abs, tag = 'smem constant byte address 0x4 - core index']
  #allocation1 [shape = 'u32[144,128]{1,0:T(1,128)}', space=vmem, size = 0x12000, scoped, tag = 'internal scratch']
  %s0 = inlined_call_operand.hbm [shape: f32[2,256], index: 0, kind: input, shape index: {}]
  %s1 = inlined_call_operand.hbm [shape: f32[256,128], index: 1, kind: input, shape index: {}]
  %s2 = inlined_call_operand.vmem [shape: f32[1,128], index: 2, kind: input, shape index: {}]
  %s3 = inlined_call_operand.vmem [shape: f32[1,128], index: 3, kind: input, shape index: {}]
  %s4 = inlined_call_operand.hbm [shape: f32[128,128], index: 4, kind: input, shape index: {}]
  %s5 = inlined_call_operand.hbm [shape: f32[2,128], index: 5, kind: output, shape index: {}]
  %s6 = sld [smem:[#allocation0]]
  $region42: #{tpu_custom_call.1} parent=0
    _
  %s8 = ssub.s32 1, %s6
  %s9 = scalar_select 0, %s8, %s6
  $region1: #{tpu_custom_call.1} parent=0
    #allocation2 [shape = 'u8[2048]{0}', space=vmem, size = 0x800, scoped, tag = 'input window, operand 0, single buffered']
    #allocation3 [shape = 's32[1]{0}', space=sflag, size = 0x4, scoped, tag = 'scoped memory for tpu_custom_call.1']
    #allocation4 [shape = 's32[1]{0}', space=sflag, size = 0x4, scoped, tag = 'scoped memory for tpu_custom_call.1']
    #allocation5 [shape = 'u8[131072]{0}', space=vmem, size = 0x20000, scoped, tag = 'input window, operand 1, single buffered']
    #allocation6 [shape = 's32[1]{0}', space=sflag, size = 0x4, scoped, tag = 'scoped memory for tpu_custom_call.1']
    #allocation7 [shape = 'u8[65536]{0}', space=vmem, size = 0x10000, scoped, tag = 'input window, operand 4, single buffered']
    #allocation8 [shape = 'u8[1024]{0}', space=vmem, size = 0x400, scoped, tag = 'output window, operand 0, single buffered']
    %10 = vsyncpa [#allocation3], 0
    %11 = vsyncpa [#allocation6], 0
    %12 = vsyncpa [#allocation4], 0
    // Predicated region
    $region2: #{tpu_custom_call.1} parent=1 // pred_check
      _
    $region3: #{tpu_custom_call.1} parent=1 // pred_check_branch
      %14 = sbr.rel (0) target = $region5
    $region4: #{tpu_custom_call.1} parent=1 // pred_region
      %s16 = ssub.s32 64, 64
      %17 = vsyncadd [#allocation3], %s16
      %s19 = sshll.u32 [#allocation2], 4
      %s20 = int_to_ptr.vmem [resolvable:$true] %s19
      %22 = dma.hbm_to_vmem [thread:$0]  %s0, 64, %s20, [#allocation3]
    $region5: #{tpu_custom_call.1} parent=1 // pred_fallthru
      _
    // Predicated region
    $region6: #{tpu_custom_call.1} parent=1 // pred_check
      _
    $region7: #{tpu_custom_call.1} parent=1 // pred_check_branch
      %24 = sbr.rel (0) target = $region9
    $region8: #{tpu_custom_call.1} parent=1 // pred_region
      %s26 = ssub.s32 4096, 4096
      %27 = vsyncadd [#allocation6], %s26
      %s28 = sshll.u32 [#allocation5], 4
      %s29 = int_to_ptr.vmem [resolvable:$true] %s28
      %34 = dma.hbm_to_vmem [thread:$0]  %s1, 4096, %s29, [#allocation6], 128, 128, 8
    $region9: #{tpu_custom_call.1} parent=1 // pred_fallthru
      _
    // Predicated region
    $region10: #{tpu_custom_call.1} parent=1 // pred_check
      _
    $region11: #{tpu_custom_call.1} parent=1 // pred_check_branch
      %36 = sbr.rel (0) target = $region13
    $region12: #{tpu_custom_call.1} parent=1 // pred_region
      _
    $region13: #{tpu_custom_call.1} parent=1 // pred_fallthru
      _
    // Predicated region
    $region14: #{tpu_custom_call.1} parent=1 // pred_check
      _
    $region15: #{tpu_custom_call.1} parent=1 // pred_check_branch
      %38 = sbr.rel (0) target = $region17
    $region16: #{tpu_custom_call.1} parent=1 // pred_region
      _
    $region17: #{tpu_custom_call.1} parent=1 // pred_fallthru
      _
    // Predicated region
    $region18: #{tpu_custom_call.1} parent=1 // pred_check
      _
    $region19: #{tpu_custom_call.1} parent=1 // pred_check_branch
      %40 = sbr.rel (0) target = $region21
    $region20: #{tpu_custom_call.1} parent=1 // pred_region
      %s42 = ssub.s32 2048, 2048
      %43 = vsyncadd [#allocation6], %s42
      %s44 = sshll.u32 [#allocation7], 4
      %s45 = int_to_ptr.vmem [resolvable:$true] %s44
      %50 = dma.hbm_to_vmem [thread:$0]  %s4, 2048, %s45, [#allocation6], 128, 128, 8
    $region21: #{tpu_custom_call.1} parent=1 // pred_fallthru
      _
    // Predicated region
    $region22: #{tpu_custom_call.1} parent=1 // pred_check
      _
    $region23: #{tpu_custom_call.1} parent=1 // pred_check_branch
      %52 = sbr.rel (0) target = $region25
    $region24: #{tpu_custom_call.1} parent=1 // pred_region
      %53 = dma.done [#allocation3], 64
    $region25: #{tpu_custom_call.1} parent=1 // pred_fallthru
      _
    // Predicated region
    $region26: #{tpu_custom_call.1} parent=1 // pred_check
      _
    $region27: #{tpu_custom_call.1} parent=1 // pred_check_branch
      %55 = sbr.rel (0) target = $region29
    $region28: #{tpu_custom_call.1} parent=1 // pred_region
      %56 = dma.done [#allocation6], 4096
    $region29: #{tpu_custom_call.1} parent=1 // pred_fallthru
      _
    // Predicated region
    $region30: #{tpu_custom_call.1} parent=1 // pred_check
      _
    $region31: #{tpu_custom_call.1} parent=1 // pred_check_branch
      %58 = sbr.rel (0) target = $region33
    $region32: #{tpu_custom_call.1} parent=1 // pred_region
      %59 = dma.done [#allocation6], 2048
    $region33: #{tpu_custom_call.1} parent=1 // pred_fallthru
      _
    %v60 = vld [vmem:[#allocation2] sm:$0xf]
    %v61 = vld [vmem:[#allocation5] sm:$0xff]
    %v62 = vld [vmem:[#allocation5 + $0x8] sm:$0xff]
    %v63 = vld [vmem:[#allocation5 + $0x10] sm:$0xff]
    %v64 = vld [vmem:[#allocation5 + $0x18] sm:$0xff]
    %v65 = vld [vmem:[#allocation5 + $0x20] sm:$0xff]
    %v66 = vld [vmem:[#allocation5 + $0x28] sm:$0xff]
    %v67 = vld [vmem:[#allocation5 + $0x30] sm:$0xff]
    %v68 = vld [vmem:[#allocation5 + $0x38] sm:$0xff]
    %v69 = vld [vmem:[#allocation5 + $0x40] sm:$0xff]
    %v70 = vld [vmem:[#allocation5 + $0x48] sm:$0xff]
    %v71 = vld [vmem:[#allocation5 + $0x50] sm:$0xff]
    %v72 = vld [vmem:[#allocation5 + $0x58] sm:$0xff]
    %v73 = vld [vmem:[#allocation5 + $0x60] sm:$0xff]
    %v74 = vld [vmem:[#allocation5 + $0x68] sm:$0xff]
    %v75 = vld [vmem:[#allocation5 + $0x70] sm:$0xff]
    %v76 = vld [vmem:[#allocation5 + $0x78] sm:$0xff]
    %v77 = vld [vmem:[#allocation5 + $0x80] sm:$0xff]
    %v78 = vld [vmem:[#allocation5 + $0x88] sm:$0xff]
    %v79 = vld [vmem:[#allocation5 + $0x90] sm:$0xff]
    %v80 = vld [vmem:[#allocation5 + $0x98] sm:$0xff]
    %v81 = vld [vmem:[#allocation5 + $0xa0] sm:$0xff]
    %v82 = vld [vmem:[#allocation5 + $0xa8] sm:$0xff]
    %v83 = vld [vmem:[#allocation5 + $0xb0] sm:$0xff]
    %v84 = vld [vmem:[#allocation5 + $0xb8] sm:$0xff]
    %v85 = vld [vmem:[#allocation5 + $0xc0] sm:$0xff]
    %v86 = vld [vmem:[#allocation5 + $0xc8] sm:$0xff]
    %v87 = vld [vmem:[#allocation5 + $0xd0] sm:$0xff]
    %v88 = vld [vmem:[#allocation5 + $0xd8] sm:$0xff]
    %v89 = vld [vmem:[#allocation5 + $0xe0] sm:$0xff]
    %v90 = vld [vmem:[#allocation5 + $0xe8] sm:$0xff]
    %v91 = vld [vmem:[#allocation5 + $0xf0] sm:$0xff]
    %v92 = vld [vmem:[#allocation5 + $0xf8] sm:$0xff]
    %v95 = vunpack.c.l.s4 1983009808
    %v96 = vunpack.c.0.s8 %v95
    %v97 = vlaneseq
    %v98 = vshrl.u32 %v97, 7
    %v99 = vsub.s32 %v96, %v98
    %v100 = vrot.slane %v60, %v99
    %v101 = vcombine.high %v100, %v100
    %104 = vmatprep.subr.mxu0 0.0
    %105 = vmatpush1.msra.mxu0 %v61
    %106 = vmatprep.subr.mxu0 0.0
    %107 = vmatpush1.msra.mxu0 %v62
    %108 = vmatprep.subr.mxu0 0.0
    %109 = vmatpush1.msra.mxu0 %v63
    %110 = vmatprep.subr.mxu0 0.0
    %111 = vmatpush1.msra.mxu0 %v64
    %112 = vmatprep.subr.mxu0 0.0
    %113 = vmatpush1.msra.mxu0 %v65
    %114 = vmatprep.subr.mxu0 0.0
    %115 = vmatpush1.msra.mxu0 %v66
    %116 = vmatprep.subr.mxu0 0.0
    %117 = vmatpush1.msra.mxu0 %v67
    %118 = vmatprep.subr.mxu0 0.0
    %119 = vmatpush1.msra.mxu0 %v68
    %120 = vmatprep.subr.mxu0 0.0
    %121 = vmatpush1.msra.mxu0 %v69
    %122 = vmatprep.subr.mxu0 0.0
    %123 = vmatpush1.msra.mxu0 %v70
    %124 = vmatprep.subr.mxu0 0.0
    %125 = vmatpush1.msra.mxu0 %v71
    %126 = vmatprep.subr.mxu0 0.0
    %127 = vmatpush1.msra.mxu0 %v72
    %128 = vmatprep.subr.mxu0 0.0
    %129 = vmatpush1.msra.mxu0 %v73
    %130 = vmatprep.subr.mxu0 0.0
    %131 = vmatpush1.msra.mxu0 %v74
    %132 = vmatprep.subr.mxu0 0.0
    %133 = vmatpush1.msra.mxu0 %v75
    %134 = vmatprep.subr.mxu0 0.0
    %135 = vmatpush1.msra.mxu0 %v76
    %136 = vmatprep.subr.mxu0 0.0
    %137 = vmatpush1.msra.mxu0 %v77
    %138 = vmatprep.subr.mxu0 0.0
    %139 = vmatpush1.msra.mxu0 %v78
    %140 = vmatprep.subr.mxu0 0.0
    %141 = vmatpush1.msra.mxu0 %v79
    %142 = vmatprep.subr.mxu0 0.0
    %143 = vmatpush1.msra.mxu0 %v80
    %144 = vmatprep.subr.mxu0 0.0
    %145 = vmatpush1.msra.mxu0 %v81
    %146 = vmatprep.subr.mxu0 0.0
    %147 = vmatpush1.msra.mxu0 %v82
    %148 = vmatprep.subr.mxu0 0.0
    %149 = vmatpush1.msra.mxu0 %v83
    %150 = vmatprep.subr.mxu0 0.0
    %151 = vmatpush1.msra.mxu0 %v84
    %152 = vmatprep.subr.mxu0 0.0
    %153 = vmatpush1.msra.mxu0 %v85
    %154 = vmatprep.subr.mxu0 0.0
    %155 = vmatpush1.msra.mxu0 %v86
    %156 = vmatprep.subr.mxu0 0.0
    %157 = vmatpush1.msra.mxu0 %v87
    %158 = vmatprep.subr.mxu0 0.0
    %159 = vmatpush1.msra.mxu0 %v88
    %160 = vmatprep.subr.mxu0 0.0
    %161 = vmatpush1.msra.mxu0 %v89
    %162 = vmatprep.subr.mxu0 0.0
    %163 = vmatpush1.msra.mxu0 %v90
    %164 = vmatprep.subr.mxu0 0.0
    %165 = vmatpush1.msra.mxu0 %v91
    %166 = vmatprep.subr.mxu0 0.0
    %167 = vmatpush1.msra.mxu0 %v92
    %168 = vmatprep.mubr.f32.mxu0 %v101
    %169 = vmatmul.mubr.f32.gmra.mrb[0].mxu0 %v100
    %v170 = vpop.f32.mrb[0].mxu0
    %v171 = vadd.f32 0.0, %v170
    %v172 = vpop.f32.mrb[0].mxu0
    %173 = vdwg.mxu0
    %v174 = vld [vmem:[%s2] sm:$0x1]
    %v176 = vlaneseq
    %v177 = vshrl.u32 %v176, 7
    %v178 = vsub.s32 0, %v177
    %v179 = vrot.slane %v174, %v178
    %v181 = vmul.f32 %v171, %v179
    %v182 = vld [vmem:[%s3] sm:$0x1]
    %v184 = vlaneseq
    %v185 = vshrl.u32 %v184, 7
    %v186 = vsub.s32 0, %v185
    %v187 = vrot.slane %v182, %v186
    %v189 = vadd.f32 %v181, %v187
    %v190 = vmax.f32 %v189, 0.0
    %v191 = vld [vmem:[#allocation7] sm:$0xff]
    %v192 = vld [vmem:[#allocation7 + $0x8] sm:$0xff]
    %v193 = vld [vmem:[#allocation7 + $0x10] sm:$0xff]
    %v194 = vld [vmem:[#allocation7 + $0x18] sm:$0xff]
    %v195 = vld [vmem:[#allocation7 + $0x20] sm:$0xff]
    %v196 = vld [vmem:[#allocation7 + $0x28] sm:$0xff]
    %v197 = vld [vmem:[#allocation7 + $0x30] sm:$0xff]
    %v198 = vld [vmem:[#allocation7 + $0x38] sm:$0xff]
    %v199 = vld [vmem:[#allocation7 + $0x40] sm:$0xff]
    %v200 = vld [vmem:[#allocation7 + $0x48] sm:$0xff]
    %v201 = vld [vmem:[#allocation7 + $0x50] sm:$0xff]
    %v202 = vld [vmem:[#allocation7 + $0x58] sm:$0xff]
    %v203 = vld [vmem:[#allocation7 + $0x60] sm:$0xff]
    %v204 = vld [vmem:[#allocation7 + $0x68] sm:$0xff]
    %v205 = vld [vmem:[#allocation7 + $0x70] sm:$0xff]
    %v206 = vld [vmem:[#allocation7 + $0x78] sm:$0xff]
    %207 = vmatprep.subr.mxu0 0.0
    %208 = vmatpush1.msra.mxu0 %v191
    %209 = vmatprep.subr.mxu0 0.0
    %210 = vmatpush1.msra.mxu0 %v192
    %211 = vmatprep.subr.mxu0 0.0
    %212 = vmatpush1.msra.mxu0 %v193
    %213 = vmatprep.subr.mxu0 0.0
    %214 = vmatpush1.msra.mxu0 %v194
    %215 = vmatprep.subr.mxu0 0.0
    %216 = vmatpush1.msra.mxu0 %v195
    %217 = vmatprep.subr.mxu0 0.0
    %218 = vmatpush1.msra.mxu0 %v196
    %219 = vmatprep.subr.mxu0 0.0
    %220 = vmatpush1.msra.mxu0 %v197
    %221 = vmatprep.subr.mxu0 0.0
    %222 = vmatpush1.msra.mxu0 %v198
    %223 = vmatprep.subr.mxu0 0.0
    %224 = vmatpush1.msra.mxu0 %v199
    %225 = vmatprep.subr.mxu0 0.0
    %226 = vmatpush1.msra.mxu0 %v200
    %227 = vmatprep.subr.mxu0 0.0
    %228 = vmatpush1.msra.mxu0 %v201
    %229 = vmatprep.subr.mxu0 0.0
    %230 = vmatpush1.msra.mxu0 %v202
    %231 = vmatprep.subr.mxu0 0.0
    %232 = vmatpush1.msra.mxu0 %v203
    %233 = vmatprep.subr.mxu0 0.0
    %234 = vmatpush1.msra.mxu0 %v204
    %235 = vmatprep.subr.mxu0 0.0
    %236 = vmatpush1.msra.mxu0 %v205
    %237 = vmatprep.subr.mxu0 0.0
    %238 = vmatpush1.msra.mxu0 %v206
    %239 = vmatprep.subr.mxu0 0.0
    %240 = vmatpush1.msra.mxu0 0.0
    %241 = vmatprep.subr.mxu0 0.0
    %242 = vmatpush1.msra.mxu0 0.0
    %243 = vmatprep.subr.mxu0 0.0
    %244 = vmatpush1.msra.mxu0 0.0
    %245 = vmatprep.subr.mxu0 0.0
    %246 = vmatpush1.msra.mxu0 0.0
    %247 = vmatprep.subr.mxu0 0.0
    %248 = vmatpush1.msra.mxu0 0.0
    %249 = vmatprep.subr.mxu0 0.0
    %250 = vmatpush1.msra.mxu0 0.0
    %251 = vmatprep.subr.mxu0 0.0
    %252 = vmatpush1.msra.mxu0 0.0
    %253 = vmatprep.subr.mxu0 0.0
    %254 = vmatpush1.msra.mxu0 0.0
    %255 = vmatprep.subr.mxu0 0.0
    %256 = vmatpush1.msra.mxu0 0.0
    %257 = vmatprep.subr.mxu0 0.0
    %258 = vmatpush1.msra.mxu0 0.0
    %259 = vmatprep.subr.mxu0 0.0
    %260 = vmatpush1.msra.mxu0 0.0
    %261 = vmatprep.subr.mxu0 0.0
    %262 = vmatpush1.msra.mxu0 0.0
    %263 = vmatprep.subr.mxu0 0.0
    %264 = vmatpush1.msra.mxu0 0.0
    %265 = vmatprep.subr.mxu0 0.0
    %266 = vmatpush1.msra.mxu0 0.0
    %267 = vmatprep.subr.mxu0 0.0
    %268 = vmatpush1.msra.mxu0 0.0
    %269 = vmatprep.subr.mxu0 0.0
    %270 = vmatpush1.msra.mxu0 0.0
    %271 = vmatprep.mubr.f32.mxu0 0.0
    %272 = vmatmul.mubr.f32.gmra.mrb[0].mxu0 %v190
    %v273 = vpop.f32.mrb[0].mxu0
    %v274 = vadd.f32 0.0, %v273
    %v275 = vpop.f32.mrb[0].mxu0
    %276 = vdwg.mxu0
    %277 = vst [vmem:[#allocation8] sm:$0x3] %v274
    // Predicated region
    $region34: #{tpu_custom_call.1} parent=1 // pred_check
      _
    $region35: #{tpu_custom_call.1} parent=1 // pred_check_branch
      %279 = sbr.rel (0) target = $region37
    $region36: #{tpu_custom_call.1} parent=1 // pred_region
      %s281 = ssub.s32 32, 32
      %282 = vsyncadd [#allocation4], %s281
      %s284 = sshll.u32 [#allocation8], 4
      %s285 = int_to_ptr.vmem [resolvable:$true] %s284
      %287 = dma.vmem_to_hbm [thread:$0]  %s285, 32, %s5, [#allocation4]
    $region37: #{tpu_custom_call.1} parent=1 // pred_fallthru
      _
    // Predicated region
    $region38: #{tpu_custom_call.1} parent=1 // pred_check
      _
    $region39: #{tpu_custom_call.1} parent=1 // pred_check_branch
      %289 = sbr.rel (0) target = $region41
    $region40: #{tpu_custom_call.1} parent=1 // pred_region
      %290 = dma.done [#allocation4], 32
    $region41: #{tpu_custom_call.1} parent=1 // pred_fallthru
      _
    %291 = vsyncpa [#allocation3], 1
    %292 = vsyncpa [#allocation6], 1
    %293 = vsyncpa [#allocation4], 1

</llo_original>
